<compile_context>
chip_gen: v7x
topology: tpu7x:2x2x1
jax: 0.10.0
libtpu: 0.0.40
codegen_flags: <defaults>
</compile_context>

<pallas_src>
import functools

import jax
import jax.numpy as jnp
from jax.experimental import pallas as pl
from jax.experimental.pallas import tpu as pltpu


_LANE_TILE_TARGET = 16384          # max elements along the lane axis per block (64 KiB f32)
_BLOCK_BYTES_TARGET = 512 * 1024   # per-stream block; 16 resident blocks ~= 8 MiB


def _largest_divisor(n: int, limit: int, prefer_multiple_of: int = 1) -> int:
    """Largest divisor of `n` that is <= `limit`, preferring multiples of `prefer_multiple_of`."""
    limit = max(1, min(n, limit))
    best, best_pref = 1, 0
    d = 1
    while d * d <= n:
        if n % d == 0:
            for cand in (d, n // d):
                if cand <= limit:
                    if cand > best:
                        best = cand
                    if prefer_multiple_of > 1 and cand % prefer_multiple_of == 0 and cand > best_pref:
                        best_pref = cand
        d += 1
    return best_pref if best_pref else best


def _plan_tiling(n_elems: int, itemsize: int):
    """Pick a lane-dense [R, L] view of a length-`n_elems` vector plus a row tile R_t."""
    # Lane axis: as large a multiple of 128 as divides n_elems (dense, unmasked stores).
    lane = _largest_divisor(n_elems, _LANE_TILE_TARGET, prefer_multiple_of=128)
    rows = n_elems // lane
    # Row tile: keep each per-stream block around _BLOCK_BYTES_TARGET.
    sublane = {4: 8, 2: 16, 1: 32}.get(itemsize, 8)
    max_rows = max(1, _BLOCK_BYTES_TARGET // (lane * itemsize))
    if rows <= max_rows:
        row_tile = rows
    else:
        row_tile = _largest_divisor(rows, max_rows, prefer_multiple_of=sublane)
    return lane, rows, row_tile


def _haar_kernel(xq_ref, o_ref, *, alpha, beta):
    # xq_ref / o_ref blocks: (4, R_t, L).
    # Quadrants: 0 = (even row, even col) = a, 1 = (even, odd) = b,
    #            2 = (odd, even) = c,        3 = (odd, odd)  = d.
    a = xq_ref[0]
    b = xq_ref[1]
    c = xq_ref[2]
    d = xq_ref[3]

    apb = a + b
    amb = a - b
    cpd = c + d
    cmd = c - d

    o_ref[0] = ((alpha / beta) * (apb + cpd)).astype(o_ref.dtype)   # ll
    o_ref[1] = (alpha * (apb - cpd)).astype(o_ref.dtype)            # lh
    o_ref[2] = (alpha * (amb + cmd)).astype(o_ref.dtype)            # hl
    o_ref[3] = (alpha * (amb - cmd)).astype(o_ref.dtype)            # hh


def haar_forward(x: jax.Array, beta: float = 2.0, alpha: float = 0.5) -> jax.Array:
    """2D Haar DWT forward. x: [B, C, H, W] -> [B, 4*C, H/2, W/2]."""
    assert x.ndim == 4, f"expected [B, C, H, W], got {x.shape}"
    B, C, H, W = x.shape
    assert H % 2 == 0 and W % 2 == 0, "H and W must be even"
    H2, W2 = H // 2, W // 2
    N = C * H2 * W2

    itemsize = jnp.dtype(x.dtype).itemsize
    L, R, R_t = _plan_tiling(N, itemsize)

    # Single XLA copy pass: stack the four even/odd quadrants quadrant-major and
    # lane-dense.  The two reshapes are contiguous (free); only the transpose moves data.
    xq = x.reshape(B, C, H2, 2, W2, 2)
    xq = jnp.transpose(xq, (0, 3, 5, 1, 2, 4))      # [B, 2(row parity), 2(col parity), C, H2, W2]
    xq = xq.reshape(B, 4, R, L)                     # quadrant-major, (C,H2,W2) flattened to (R, L)

    # Explicit VMEM budget: (4 quadrant blocks + 4 band blocks) x 2 pipeline buffers.
    block_bytes = R_t * L * itemsize
    resident = 2 * (4 + 4) * block_bytes
    vmem_limit = int(min(64 * 1024 * 1024, max(16 * 1024 * 1024, 2 * resident)))

    grid = (B, R // R_t)
    spec = pl.BlockSpec((None, 4, R_t, L), lambda b, r: (b, 0, r, 0))

    out = pl.pallas_call(
        functools.partial(_haar_kernel, alpha=float(alpha), beta=float(beta)),
        out_shape=jax.ShapeDtypeStruct((B, 4, R, L), x.dtype),
        grid=grid,
        in_specs=[spec],
        out_specs=spec,
        compiler_params=pltpu.CompilerParams(
            dimension_semantics=("parallel", "parallel"),
            vmem_limit_bytes=vmem_limit,
        ),
    )(xq)

    # [B, 4, R, L] -> [B, 4, C, H2, W2] -> [B, 4*C, H2, W2]: contiguous (free) reshapes,
    # reproducing torch.cat([ll, lh, hl, hh], dim=1).
    return out.reshape(B, 4 * C, H2, W2)


def haar_forward_ref(x: jax.Array, beta: float = 2.0, alpha: float = 0.5) -> jax.Array:
    """Pure-JAX reference mirroring the PyTorch module."""
    a = x[:, :, 0::2, 0::2]
    b = x[:, :, 0::2, 1::2]
    c = x[:, :, 1::2, 0::2]
    d = x[:, :, 1::2, 1::2]
    ll = alpha / beta * (a + b + c + d)
    lh = alpha * (a + b - c - d)
    hl = alpha * (a - b + c - d)
    hh = alpha * (a - b - c + d)
    return jnp.concatenate([ll, lh, hl, hh], axis=1)


if __name__ == "__main__":
    key = jax.random.PRNGKey(0)
    B, C, H, W = 2, 4, 16, 16
    x = jax.random.normal(key, (B, C, H, W), dtype=jnp.float32)

    out = haar_forward(x, beta=2.0)          # default beta=2 as in HaarForward()
    out = jax.block_until_ready(out)

    ref = haar_forward_ref(x, beta=2.0)
    assert out.shape == (B, 4 * C, H // 2, W // 2), out.shape
    assert jnp.allclose(out, ref, atol=1e-6, rtol=1e-6), "mismatch vs reference"

    print("KERNEL_OK")
</pallas_src>

<mosaic_0001>
module attributes {stable_mosaic.version = 11 : i64} {
  func.func @_haar_kernel(%arg0: i32, %arg1: i32, %arg2: memref<1x4x1x256xf32, #tpu.memory_space<vmem>>, %arg3: memref<1x4x1x256xf32, #tpu.memory_space<vmem>>) attributes {dimension_semantics = [#tpu.dimension_semantics<parallel>, #tpu.dimension_semantics<parallel>], iteration_bounds = array<i64: 2, 1>, scalar_prefetch = 0 : i64, scratch_operands = 0 : i64, tpu.core_type = #tpu.core_type<tc>, window_params = [{transform_indices = @transform_0, window_bounds = array<i64: 1, 4, 1, 256>}, {transform_indices = @transform_1, window_bounds = array<i64: 1, 4, 1, 256>}]} {
    %c0 = arith.constant 0 : index
    %c0_0 = arith.constant 0 : index
    %c0_1 = arith.constant 0 : index
    %c0_2 = arith.constant 0 : index
    %0 = vector.load %arg2[%c0, %c0_0, %c0_1, %c0_2] : memref<1x4x1x256xf32, #tpu.memory_space<vmem>>, vector<1x1x1x256xf32>
    %1 = vector.shape_cast %0 : vector<1x1x1x256xf32> to vector<1x256xf32>
    %c0_3 = arith.constant 0 : index
    %c1 = arith.constant 1 : index
    %c0_4 = arith.constant 0 : index
    %c0_5 = arith.constant 0 : index
    %2 = vector.load %arg2[%c0_3, %c1, %c0_4, %c0_5] : memref<1x4x1x256xf32, #tpu.memory_space<vmem>>, vector<1x1x1x256xf32>
    %3 = vector.shape_cast %2 : vector<1x1x1x256xf32> to vector<1x256xf32>
    %c0_6 = arith.constant 0 : index
    %c2 = arith.constant 2 : index
    %c0_7 = arith.constant 0 : index
    %c0_8 = arith.constant 0 : index
    %4 = vector.load %arg2[%c0_6, %c2, %c0_7, %c0_8] : memref<1x4x1x256xf32, #tpu.memory_space<vmem>>, vector<1x1x1x256xf32>
    %5 = vector.shape_cast %4 : vector<1x1x1x256xf32> to vector<1x256xf32>
    %c0_9 = arith.constant 0 : index
    %c3 = arith.constant 3 : index
    %c0_10 = arith.constant 0 : index
    %c0_11 = arith.constant 0 : index
    %6 = vector.load %arg2[%c0_9, %c3, %c0_10, %c0_11] : memref<1x4x1x256xf32, #tpu.memory_space<vmem>>, vector<1x1x1x256xf32>
    %7 = vector.shape_cast %6 : vector<1x1x1x256xf32> to vector<1x256xf32>
    %8 = arith.addf %1, %3 : vector<1x256xf32>
    %9 = arith.subf %1, %3 : vector<1x256xf32>
    %10 = arith.addf %5, %7 : vector<1x256xf32>
    %11 = arith.subf %5, %7 : vector<1x256xf32>
    %12 = arith.addf %8, %10 : vector<1x256xf32>
    %cst = arith.constant 2.500000e-01 : f32
    %13 = vector.broadcast %cst : f32 to vector<1x256xf32>
    %14 = arith.mulf %13, %12 : vector<1x256xf32>
    %c0_12 = arith.constant 0 : index
    %c0_13 = arith.constant 0 : index
    %c0_14 = arith.constant 0 : index
    %c0_15 = arith.constant 0 : index
    %15 = vector.load %arg3[%c0_12, %c0_13, %c0_14, %c0_15] : memref<1x4x1x256xf32, #tpu.memory_space<vmem>>, vector<1x1x1x256xf32>
    %16 = vector.shape_cast %15 : vector<1x1x1x256xf32> to vector<1x256xf32>
    %17 = vector.shape_cast %14 : vector<1x256xf32> to vector<1x1x1x256xf32>
    tpu.vector_store %arg3[%c0_12, %c0_13, %c0_14, %c0_15], %17 {strides = array<i32>} : memref<1x4x1x256xf32, #tpu.memory_space<vmem>>, vector<1x1x1x256xf32>,
    %18 = arith.subf %8, %10 : vector<1x256xf32>
    %cst_16 = arith.constant 5.000000e-01 : f32
    %19 = vector.broadcast %cst_16 : f32 to vector<1x256xf32>
    %20 = arith.mulf %19, %18 : vector<1x256xf32>
    %c0_17 = arith.constant 0 : index
    %c1_18 = arith.constant 1 : index
    %c0_19 = arith.constant 0 : index
    %c0_20 = arith.constant 0 : index
    %21 = vector.load %arg3[%c0_17, %c1_18, %c0_19, %c0_20] : memref<1x4x1x256xf32, #tpu.memory_space<vmem>>, vector<1x1x1x256xf32>
    %22 = vector.shape_cast %21 : vector<1x1x1x256xf32> to vector<1x256xf32>
    %23 = vector.shape_cast %20 : vector<1x256xf32> to vector<1x1x1x256xf32>
    tpu.vector_store %arg3[%c0_17, %c1_18, %c0_19, %c0_20], %23 {strides = array<i32>} : memref<1x4x1x256xf32, #tpu.memory_space<vmem>>, vector<1x1x1x256xf32>,
    %24 = arith.addf %9, %11 : vector<1x256xf32>
    %cst_21 = arith.constant 5.000000e-01 : f32
    %25 = vector.broadcast %cst_21 : f32 to vector<1x256xf32>
    %26 = arith.mulf %25, %24 : vector<1x256xf32>
    %c0_22 = arith.constant 0 : index
    %c2_23 = arith.constant 2 : index
    %c0_24 = arith.constant 0 : index
    %c0_25 = arith.constant 0 : index
    %27 = vector.load %arg3[%c0_22, %c2_23, %c0_24, %c0_25] : memref<1x4x1x256xf32, #tpu.memory_space<vmem>>, vector<1x1x1x256xf32>
    %28 = vector.shape_cast %27 : vector<1x1x1x256xf32> to vector<1x256xf32>
    %29 = vector.shape_cast %26 : vector<1x256xf32> to vector<1x1x1x256xf32>
    tpu.vector_store %arg3[%c0_22, %c2_23, %c0_24, %c0_25], %29 {strides = array<i32>} : memref<1x4x1x256xf32, #tpu.memory_space<vmem>>, vector<1x1x1x256xf32>,
    %30 = arith.subf %9, %11 : vector<1x256xf32>
    %cst_26 = arith.constant 5.000000e-01 : f32
    %31 = vector.broadcast %cst_26 : f32 to vector<1x256xf32>
    %32 = arith.mulf %31, %30 : vector<1x256xf32>
    %c0_27 = arith.constant 0 : index
    %c3_28 = arith.constant 3 : index
    %c0_29 = arith.constant 0 : index
    %c0_30 = arith.constant 0 : index
    %33 = vector.load %arg3[%c0_27, %c3_28, %c0_29, %c0_30] : memref<1x4x1x256xf32, #tpu.memory_space<vmem>>, vector<1x1x1x256xf32>
    %34 = vector.shape_cast %33 : vector<1x1x1x256xf32> to vector<1x256xf32>
    %35 = vector.shape_cast %32 : vector<1x256xf32> to vector<1x1x1x256xf32>
    tpu.vector_store %arg3[%c0_27, %c3_28, %c0_29, %c0_30], %35 {strides = array<i32>} : memref<1x4x1x256xf32, #tpu.memory_space<vmem>>, vector<1x1x1x256xf32>,
    return
  }
  func.func @transform_0(%arg0: i32, %arg1: i32) -> (i32, i32, i32, i32) {
    %c0_i32 = arith.constant 0 : i32
    %c0_i32_0 = arith.constant 0 : i32
    %c0_i32_1 = arith.constant 0 : i32
    return %arg0, %c0_i32, %arg1, %c0_i32_0 : i32, i32, i32, i32
  }
  func.func @transform_1(%arg0: i32, %arg1: i32) -> (i32, i32, i32, i32) {
    %c0_i32 = arith.constant 0 : i32
    %c0_i32_0 = arith.constant 0 : i32
    %c0_i32_1 = arith.constant 0 : i32
    return %arg0, %c0_i32, %arg1, %c0_i32_0 : i32, i32, i32, i32
  }
}

</mosaic_0001>

<llo_original>
// kernel: tpu_custom_call.1
$region0: #{tpu_custom_call.1}
  #allocation0 [shape = 'u32[]', space=smem, size = 0x4, offset = 0x4, fixed_abs, tag = 'smem constant byte address 0x4 - core index']
  #allocation1 [shape = 'u32[144,128]{1,0:T(1,128)}', space=vmem, size = 0x12000, scoped, tag = 'internal scratch']
  %s0 = inlined_call_operand.hbm [shape: f32[2,4,1,256], index: 0, kind: input, shape index: {}]
  %s1 = inlined_call_operand.hbm [shape: f32[2,4,1,256], index: 1, kind: output, shape index: {}]
  %s2 = sld [smem:[#allocation0]]
  $region41: #{tpu_custom_call.1} parent=0
    _
  %s4 = ssub.s32 1, %s2
  %s5 = scalar_select 0, %s4, %s2
  $region1: #{tpu_custom_call.1} parent=0
    #allocation2 [shape = 'u8[8192]{0}', space=vmem, size = 0x2000, scoped, tag = 'input window, operand 0']
    #allocation3 [shape = 's32[2]{0}', space=sflag, size = 0x8, scoped, tag = 'scoped memory for tpu_custom_call.1']
    #allocation4 [shape = 's32[2]{0}', space=sflag, size = 0x8, scoped, tag = 'scoped memory for tpu_custom_call.1']
    #allocation5 [shape = 'u8[8192]{0}', space=vmem, size = 0x2000, scoped, tag = 'output window, operand 0']
    %6 = vsyncpa [#allocation3], 0
    %s7 = scalar_lea.sflag [#allocation3], 1
    %8 = vsyncpa %s7, 0
    %9 = vsyncpa [#allocation4], 0
    %s10 = scalar_lea.sflag [#allocation4], 1
    %11 = vsyncpa %s10, 0
    loop: start=0, step=1, limit=4
    $region2: #{tpu_custom_call.1} parent=1 // loop_pre_header
      _
    $region3: #{tpu_custom_call.1} parent=1 // loop_header
      %s13 = sphi 0, %s17
      %p14 = scmp.ge.s32.totalorder %s13, 4
      %s20 = sphi 0, %s32
      %s21 = sphi 0, %s28
      %s22 = sphi 0, %s20
      %s23 = sphi 0, %s21
      %s24 = sphi 0, %s22
      %s25 = sphi 0, %s23
      %s37 = sphi 0, %s39
      %s40 = sphi 0, %s37
      %s41 = sphi 0, %s40
      %s57 = sphi 0, %s41
      %s65 = sphi 0, %s67
      %s68 = sphi 0, %s65
      %s69 = sphi 0, %s68
      %s85 = sphi 0, %s69
    $region4: #{tpu_custom_call.1} parent=1 // loop_header_branch
      %16 = sbr.rel (%p14) target = $region8
    $region5: #{tpu_custom_call.1} parent=1 // loop_body
      %s18 = ssub.s32 %s13, 1
      %s19 = ssub.s32 %s13, 2
      %s26 = sadd.s32 1, %s21
      %p27 = scmp.ge.s32.totalorder %s26, 1
      %s28 = scalar_select %p27, 0, %s26
      %s29 = sadd.s32 1, %s20
      %s30 = scalar_select %p27, %s29, %s20
      %p31 = scmp.ge.s32.totalorder %s30, 2
      %s32 = scalar_select %p31, 0, %s30
      %s33 = ssub.s32 %s20, %s32
      %s34 = ssub.s32 %s21, %s28
      %s35 = sor.u32 %s33, %s34
      %p36 = scmp.eq.s32.totalorder %s35, 0
      %s38 = sadd.s32 %s37, 1
      %s39 = scalar_select %p36, %s37, %s38
      %p42 = pneg %p36
      %p43 = scmp.eq.s32.totalorder %s13, 1
      %p44 = por %p42, %p43
      %p45 = scmp.ne.s32.totalorder %s37, %s40
      %p46 = scmp.eq.s32.totalorder %s13, 0
      %p47 = por %p45, %p46
      %p48 = scmp.ne.s32.totalorder %s37, %s40
      %p49 = scmp.eq.s32.totalorder %s18, 1
      %p50 = por %p48, %p49
      %p51 = scmp.ne.s32.totalorder %s40, %s41
      %p52 = scmp.eq.s32.totalorder %s18, 0
      %p53 = por %p51, %p52
      %p54 = scmp.ne.s32.totalorder %s40, %s41
      %p55 = scmp.eq.s32.totalorder %s19, 1
      %p56 = por %p54, %p55
      %p58 = scmp.ne.s32.totalorder %s41, %s57
      %p59 = scmp.eq.s32.totalorder %s19, 0
      %p60 = por %p58, %p59
      %s61 = ssub.s32 %s20, %s32
      %s62 = ssub.s32 %s21, %s28
      %s63 = sor.u32 %s61, %s62
      %p64 = scmp.eq.s32.totalorder %s63, 0
      %s66 = sadd.s32 %s65, 1
      %s67 = scalar_select %p64, %s65, %s66
      %p70 = pneg %p64
      %p71 = scmp.eq.s32.totalorder %s13, 1
      %p72 = por %p70, %p71
      %p73 = scmp.ne.s32.totalorder %s65, %s68
      %p74 = scmp.eq.s32.totalorder %s13, 0
      %p75 = por %p73, %p74
      %p76 = scmp.ne.s32.totalorder %s65, %s68
      %p77 = scmp.eq.s32.totalorder %s18, 1
      %p78 = por %p76, %p77
      %p79 = scmp.ne.s32.totalorder %s68, %s69
      %p80 = scmp.eq.s32.totalorder %s18, 0
      %p81 = por %p79, %p80
      %p82 = scmp.ne.s32.totalorder %s68, %s69
      %p83 = scmp.eq.s32.totalorder %s19, 1
      %p84 = por %p82, %p83
      %p86 = scmp.ne.s32.totalorder %s69, %s85
      %p87 = scmp.eq.s32.totalorder %s19, 0
      %p88 = por %p86, %p87
      %p89 = scmp.le.s32.totalorder 1, %s13
      %p90 = scmp.lt.s32.totalorder %s13, 3
      %p91 = pnand %p89, %p90
      %p92 = pneg %p91
      // Predicated region
      $region9: #{tpu_custom_call.1} parent=5 // pred_check
        _
      $region10: #{tpu_custom_call.1} parent=5 // pred_check_branch
        %94 = sbr.rel (%p91) target = $region12
      $region11: #{tpu_custom_call.1} parent=5 // pred_region
        %s95 = ssub.s32 %s13, 1
      $region12: #{tpu_custom_call.1} parent=5 // pred_fallthru
        _
      %p96 = scmp.lt.s32.totalorder %s13, 2
      // Predicated region
      $region13: #{tpu_custom_call.1} parent=5 // pred_check
        %p97 = pneg %p96
      $region14: #{tpu_custom_call.1} parent=5 // pred_check_branch
        %99 = sbr.rel (%p97) target = $region16
      $region15: #{tpu_custom_call.1} parent=5 // pred_region
        // Predicated region
        $region17: #{tpu_custom_call.1} parent=15 // pred_check
          %p100 = pneg %p47
        $region18: #{tpu_custom_call.1} parent=15 // pred_check_branch
          %102 = sbr.rel (%p100) target = $region20
        $region19: #{tpu_custom_call.1} parent=15 // pred_region
          %s103 = sand.u32 %s37, 1
          %s104 = scalar_lea.sflag [#allocation3], %s103
          %s105 = sand.u32 %s37, 1
          %s106 = smul.addr %s105, 8
          %s107 = scalar_lea.vmem [#allocation2], %s106
          %s109 = ssub.s32 128, 128
          %110 = vsyncadd %s104, %s109
          %s111 = smul.addr %s21, 2
          %s112 = smul.addr %s20, 8
          %s113 = sadd.s32 %s111, %s112
          %s114 = smul.addr %s113, 16
          %s115 = scalar_lea.hbm %s0, %s114
          %s116 = sshll.u32 %s107, 4
          %s117 = int_to_ptr.vmem [resolvable:$true] %s116
          %122 = dma.hbm_to_vmem [thread:$0]  %s115, 128, %s117, %s104, 32, 32, 2
        $region20: #{tpu_custom_call.1} parent=15 // pred_fallthru
          _
      $region16: #{tpu_custom_call.1} parent=5 // pred_fallthru
        _
      %p123 = scmp.le.s32.totalorder 1, %s13
      %p124 = scmp.lt.s32.totalorder %s13, 3
      %p125 = pnand %p123, %p124
      %p126 = pneg %p125
      // Predicated region
      $region21: #{tpu_custom_call.1} parent=5 // pred_check
        _
      $region22: #{tpu_custom_call.1} parent=5 // pred_check_branch
        %128 = sbr.rel (%p125) target = $region24
      $region23: #{tpu_custom_call.1} parent=5 // pred_region
        %s129 = ssub.s32 %s13, 1
        %s130 = sand.u32 %s40, 1
        %s131 = scalar_lea.sflag [#allocation3], %s130
        %s132 = sand.u32 %s40, 1
        %s133 = smul.addr %s132, 8
        %s134 = scalar_lea.vmem [#allocation2], %s133
        // Predicated region
        $region25: #{tpu_custom_call.1} parent=23 // pred_check
          %p135 = pneg %p53
        $region26: #{tpu_custom_call.1} parent=23 // pred_check_branch
          %137 = sbr.rel (%p135) target = $region28
        $region27: #{tpu_custom_call.1} parent=23 // pred_region
          %138 = dma.done %s131, 128
        $region28: #{tpu_custom_call.1} parent=23 // pred_fallthru
          _
        %s139 = sand.u32 %s40, 1
        %s140 = scalar_lea.sflag [#allocation3], %s139
        %s141 = sand.u32 %s40, 1
        %s142 = smul.addr %s141, 8
        %s143 = scalar_lea.vmem [#allocation2], %s142
        %p144 = pneg %p53
        %p145 = pneg %p50
        %p146 = pneg %p81
        %p147 = pneg %p78
        %s148 = sand.u32 %s68, 1
        %s149 = scalar_lea.sflag [#allocation4], %s148
        %s150 = sand.u32 %s68, 1
        %s151 = smul.addr %s150, 8
        %s152 = scalar_lea.vmem [#allocation5], %s151
        %v153 = vld [vmem:[%s134] sm:$0x3]
        %s154 = scalar_lea.vmem %s134, 2 [#allocation2]
        %v155 = vld [vmem:[%s154] sm:$0x3]
        %s156 = scalar_lea.vmem %s134, 4 [#allocation2]
        %v157 = vld [vmem:[%s156] sm:$0x3]
        %s158 = scalar_lea.vmem %s134, 6 [#allocation2]
        %v159 = vld [vmem:[%s158] sm:$0x3]
        %v160 = vadd.f32 %v153, %v155
        %v161 = vsub.f32 %v153, %v155
        %v162 = vadd.f32 %v157, %v159
        %v163 = vsub.f32 %v157, %v159
        %v164 = vadd.f32 %v160, %v162
        %v165 = vmul.f32 %v164, 0.25
        %v166 = vlaneseq
        %vm167 = vcmp.ge.s32.totalorder %v166, 0
        %vm168 = vcmp.lt.s32.totalorder %v166, 256
        %vm169 = vmand %vm167, %vm168
        %170 = vst.msk [vmem:[%s152] sm:$0x3] %vm169, %v165
        %v171 = vsub.f32 %v160, %v162
        %v172 = vmul.f32 %v171, 0.5
        %s173 = scalar_lea.vmem %s152, 2 [#allocation5]
        %174 = vst.msk [vmem:[%s173] sm:$0x3] %vm169, %v172
        %v175 = vadd.f32 %v161, %v163
        %v176 = vmul.f32 %v175, 0.5
        %s177 = scalar_lea.vmem %s152, 4 [#allocation5]
        %178 = vst.msk [vmem:[%s177] sm:$0x3] %vm169, %v176
        %v179 = vsub.f32 %v161, %v163
        %v180 = vmul.f32 %v179, 0.5
        %s181 = scalar_lea.vmem %s152, 6 [#allocation5]
        %182 = vst.msk [vmem:[%s181] sm:$0x3] %vm169, %v180
        %s183 = sand.u32 %s68, 1
        %s184 = scalar_lea.sflag [#allocation4], %s183
        %s185 = sand.u32 %s68, 1
        %s186 = smul.addr %s185, 8
        %s187 = scalar_lea.vmem [#allocation5], %s186
        // Predicated region
        $region29: #{tpu_custom_call.1} parent=23 // pred_check
          %p188 = pneg %p78
        $region30: #{tpu_custom_call.1} parent=23 // pred_check_branch
          %190 = sbr.rel (%p188) target = $region32
        $region31: #{tpu_custom_call.1} parent=23 // pred_region
          %s192 = ssub.s32 128, 128
          %193 = vsyncadd %s184, %s192
          %s194 = smul.addr %s23, 2
          %s195 = smul.addr %s22, 8
          %s196 = sadd.s32 %s194, %s195
          %s197 = smul.addr %s196, 16
          %s198 = scalar_lea.hbm %s1, %s197
          %s199 = sshll.u32 %s187, 4
          %s200 = int_to_ptr.vmem [resolvable:$true] %s199
          %205 = dma.vmem_to_hbm [thread:$0]  %s200, 128, %s198, %s184, 32, 32, 2
        $region32: #{tpu_custom_call.1} parent=23 // pred_fallthru
          _
      $region24: #{tpu_custom_call.1} parent=5 // pred_fallthru
        _
      %p206 = scmp.le.s32.totalorder 2, %s13
      // Predicated region
      $region33: #{tpu_custom_call.1} parent=5 // pred_check
        %p207 = pneg %p206
      $region34: #{tpu_custom_call.1} parent=5 // pred_check_branch
        %209 = sbr.rel (%p207) target = $region36
      $region35: #{tpu_custom_call.1} parent=5 // pred_region
        %s210 = ssub.s32 %s13, 2
        // Predicated region
        $region37: #{tpu_custom_call.1} parent=35 // pred_check
          %p211 = pneg %p84
        $region38: #{tpu_custom_call.1} parent=35 // pred_check_branch
          %213 = sbr.rel (%p211) target = $region40
        $region39: #{tpu_custom_call.1} parent=35 // pred_region
          %s214 = sand.u32 %s69, 1
          %s215 = scalar_lea.sflag [#allocation4], %s214
          %s216 = sand.u32 %s69, 1
          %s217 = smul.addr %s216, 8
          %s218 = scalar_lea.vmem [#allocation5], %s217
          %219 = dma.done %s215, 128
        $region40: #{tpu_custom_call.1} parent=35 // pred_fallthru
          _
      $region36: #{tpu_custom_call.1} parent=5 // pred_fallthru
        _
    $region6: #{tpu_custom_call.1} parent=1 // loop_footer
      %s17 = sadd.s32 1, %s13
    $region7: #{tpu_custom_call.1} parent=1 // loop_footer_branch
      %12 = sbr.rel target = $region3
    $region8: #{tpu_custom_call.1} parent=1 // loop_exit
      _
    %220 = vsyncpa [#allocation3], 1
    %s221 = scalar_lea.sflag [#allocation3], 1
    %222 = vsyncpa %s221, 1
    %223 = vsyncpa [#allocation4], 1
    %s224 = scalar_lea.sflag [#allocation4], 1
    %225 = vsyncpa %s224, 1

</llo_original>
